<compile_context>
chip_gen: v5e
topology: v5e:2x2
jax: 0.10.0
libtpu: 0.0.40
codegen_flags: <defaults>
</compile_context>

<pallas_src>
import jax
import jax.numpy as jnp
from jax.experimental import pallas as pl
from jax.experimental.pallas import tpu as pltpu

_LANE = 128  # TPU lane width


# ---------------------------------------------------------------------------
# Backward Pallas kernel:  o = g * (-coeff)      (coeff is an SMEM scalar)
# ---------------------------------------------------------------------------
def _grl_bwd_kernel(coeff_ref, g_ref, o_ref):
    neg_c = (-coeff_ref[0, 0]).astype(g_ref.dtype)
    o_ref[...] = g_ref[...] * neg_c


# ---------------------------------------------------------------------------
# Per-chip tiling budget
# ---------------------------------------------------------------------------
def _tile_budget():
    """(per-buffer tile bytes, vmem_limit_bytes or None) per TPU generation."""
    kind = ""
    try:
        kind = jax.devices()[0].device_kind.lower()
    except Exception:  # pragma: no cover - be robust to odd runtimes
        pass
    if ("v6" in kind) or ("v7" in kind):
        # v6e/v7x: bigger tiles amortize per-grid-step overhead against
        # 1.4-3.2 TB/s HBM.  4 live buffers (double-buffered in+out) * 6 MiB
        # = 24 MiB; raise scoped VMEM to leave headroom (v7x physical: 64 MiB).
        return 6 << 20, 40 << 20
    # v5e (16 MiB default scoped VMEM) and unknown chips: stay conservative.
    # 4 live buffers * 3 MiB = 12 MiB < 16 MiB, no limit raise needed.
    return 3 << 20, None


def _row_tile(rows, cols, itemsize, sublane, tile_bytes):
    """Row tile: <= tile_bytes per buffer, multiple of 8 (sublane-aligned when
    possible), and capped so large tensors get >= ~4 pipeline steps."""
    bytes_per_row = cols * itemsize
    tr = tile_bytes // bytes_per_row          # caller guarantees >= 8
    if rows * bytes_per_row > (4 << 20):      # keep >= ~4 grid steps for
        quarter = pl.cdiv(rows, 4)            # DMA overlap / 2-TC sharding
        if quarter >= 8:
            tr = min(tr, quarter)
    if tr >= rows:
        return rows                           # single block == full dims (legal)
    step = sublane if tr >= sublane else 8
    return max(8, (tr // step) * step)


# ---------------------------------------------------------------------------
# Backward dispatch
# ---------------------------------------------------------------------------
def _grl_bwd_call(g, coeff):
    """Compute -coeff * g (coeff is a float32 scalar array, possibly traced)."""

    def _fused_fallback():
        # Plain scale: XLA fuses it into the adjacent backward ops.
        return g * (-coeff).astype(g.dtype)

    if g.ndim == 0 or g.size == 0:
        return _fused_fallback()

    cols = g.shape[-1]
    if cols % _LANE != 0:
        # Repacking the lane dimension on TPU tiled layouts forces relayout
        # copies that can double HBM traffic for a bandwidth-bound op; let
        # XLA fuse the scale instead for these shapes.
        return _fused_fallback()

    itemsize = g.dtype.itemsize
    tile_bytes, vmem_limit = _tile_budget()
    if 8 * cols * itemsize > tile_bytes:
        # Even a minimal (8, cols) tile would blow the per-buffer VMEM budget.
        return _fused_fallback()

    rows = g.size // cols
    sublane = {1: 32, 2: 16}.get(itemsize, 8)
    tr = _row_tile(rows, cols, itemsize, sublane, tile_bytes)

    g2d = g.reshape(rows, cols)               # leading-dim flatten: layout-free
    coeff_smem = coeff.astype(jnp.float32).reshape(1, 1)

    # TODO(synk): add input_output_aliases={1: 0} when the cotangent buffer is
    # known to be donatable (halves peak HBM footprint, same bandwidth).
    out2d = pl.pallas_call(
        _grl_bwd_kernel,
        out_shape=jax.ShapeDtypeStruct((rows, cols), g2d.dtype),
        grid=(pl.cdiv(rows, tr),),
        in_specs=[
            pl.BlockSpec(memory_space=pltpu.MemorySpace.SMEM),  # coeff scalar
            pl.BlockSpec((tr, cols), lambda i: (i, 0)),
        ],
        out_specs=pl.BlockSpec((tr, cols), lambda i: (i, 0)),
        compiler_params=pltpu.CompilerParams(
            dimension_semantics=("parallel",),  # shard rows across v7x's 2 TCs
            vmem_limit_bytes=vmem_limit,
        ),
        cost_estimate=pl.CostEstimate(
            flops=rows * cols,
            transcendentals=0,
            bytes_accessed=2 * rows * cols * itemsize,
        ),
    )(coeff_smem, g2d)
    return out2d.reshape(g.shape)


# ---------------------------------------------------------------------------
# custom_vjp: identity forward, gradient-reversal backward
# ---------------------------------------------------------------------------
@jax.custom_vjp
def _gradient_reverse(x, coeff):
    return x


def _grl_fwd(x, coeff):
    return x, coeff


def _grl_bwd(coeff, g):
    # Matches PyTorch: (grad_output.neg() * coeff, None) -> zero cotangent
    # for coeff (it is not differentiated through).
    return _grl_bwd_call(g, coeff), jnp.zeros_like(coeff)


_gradient_reverse.defvjp(_grl_fwd, _grl_bwd)


def gradient_reverse(x, coeff=1.0):
    """GradientReverseLayer: identity forward, -coeff * g backward."""
    coeff = jnp.asarray(coeff, dtype=jnp.float32)   # works for floats & tracers
    return _gradient_reverse(x, coeff)


class GradientReverseLayer:
    """JAX/Pallas equivalent of the PyTorch GradientReverseLayer (stateless)."""

    def __call__(self, x, coeff=1.0):
        return gradient_reverse(x, coeff)


# ---------------------------------------------------------------------------
if __name__ == "__main__":
    key = jax.random.PRNGKey(0)

    # Feature tensor fed to GRL ahead of a domain classifier:
    # batch=2, seq=8, hidden=256 (lane-dense last dim -> Pallas backward path).
    x = jax.random.normal(key, (2, 8, 256), dtype=jnp.float32)

    layer = GradientReverseLayer()

    # Forward: identity (no kernel, no HBM traffic).
    y = jax.block_until_ready(layer(x, 0.75))
    assert y.shape == x.shape and y.dtype == x.dtype
    assert bool(jnp.all(y == x)), "forward must be identity"

    # Backward through the Pallas kernel: d/dx sum(2 * GRL(x)) = -coeff * 2.
    coeff = 0.75
    grads = jax.block_until_ready(
        jax.grad(lambda inp: jnp.sum(gradient_reverse(inp, coeff) * 2.0))(x))
    expected = jnp.full_like(x, -coeff * 2.0)
    assert grads.shape == x.shape and grads.dtype == x.dtype
    assert bool(jnp.allclose(grads, expected, atol=1e-6)), "backward must be -coeff*g"

    # Conv-shaped features (last dim 16): exercises the fused jnp fallback.
    x2 = jax.random.normal(jax.random.PRNGKey(1), (2, 4, 16, 16), dtype=jnp.float32)
    g2 = jax.block_until_ready(
        jax.grad(lambda inp: jnp.sum(gradient_reverse(inp, 0.5)))(x2))
    assert bool(jnp.allclose(g2, jnp.full_like(x2, -0.5), atol=1e-6))

    # Scheduled (traced) coeff under jit: no recompile per value, no trace error.
    g3 = jax.block_until_ready(
        jax.jit(jax.grad(lambda inp, c: jnp.sum(gradient_reverse(inp, c))))(
            x, jnp.float32(1.5)))
    assert bool(jnp.allclose(g3, jnp.full_like(x, -1.5), atol=1e-6))

    print("KERNEL_OK")
</pallas_src>

<mosaic_0001>
module attributes {stable_mosaic.version = 11 : i64} {
  func.func @_grl_bwd_kernel(%arg0: i32, %arg1: memref<1x1xf32, #tpu.memory_space<smem>>, %arg2: memref<16x256xf32, #tpu.memory_space<vmem>>, %arg3: memref<16x256xf32, #tpu.memory_space<vmem>>) attributes {dimension_semantics = [#tpu.dimension_semantics<parallel>], iteration_bounds = array<i64: 1>, scalar_prefetch = 0 : i64, scratch_operands = 0 : i64, tpu.core_type = #tpu.core_type<tc>, window_params = [{transform_indices = @transform_0, window_bounds = array<i64: 1, 1>}, {transform_indices = @transform_1, window_bounds = array<i64: 16, 256>}, {transform_indices = @transform_2, window_bounds = array<i64: 16, 256>}]} {
    %c0 = arith.constant 0 : index
    %c0_0 = arith.constant 0 : index
    %0 = memref.load %arg1[%c0, %c0_0] : memref<1x1xf32, #tpu.memory_space<smem>>
    %cst = arith.constant 0.000000e+00 : f32
    %1 = arith.subf %cst, %0 : f32
    %c0_1 = arith.constant 0 : index
    %c0_2 = arith.constant 0 : index
    %2 = vector.load %arg2[%c0_1, %c0_2] : memref<16x256xf32, #tpu.memory_space<vmem>>, vector<16x256xf32>
    %3 = vector.broadcast %1 : f32 to vector<16x256xf32>
    %4 = arith.mulf %2, %3 : vector<16x256xf32>
    %c0_3 = arith.constant 0 : index
    %c0_4 = arith.constant 0 : index
    %5 = vector.load %arg3[%c0_3, %c0_4] : memref<16x256xf32, #tpu.memory_space<vmem>>, vector<16x256xf32>
    tpu.vector_store %arg3[%c0_3, %c0_4], %4 {strides = array<i32>} : memref<16x256xf32, #tpu.memory_space<vmem>>, vector<16x256xf32>,
    return
  }
  func.func @transform_0(%arg0: i32) -> (i32, i32) {
    %c0_i32 = arith.constant 0 : i32
    %c0_i32_0 = arith.constant 0 : i32
    %c0_i32_1 = arith.constant 0 : i32
    return %c0_i32, %c0_i32_0 : i32, i32
  }
  func.func @transform_1(%arg0: i32) -> (i32, i32) {
    %c0_i32 = arith.constant 0 : i32
    %c0_i32_0 = arith.constant 0 : i32
    return %arg0, %c0_i32 : i32, i32
  }
  func.func @transform_2(%arg0: i32) -> (i32, i32) {
    %c0_i32 = arith.constant 0 : i32
    %c0_i32_0 = arith.constant 0 : i32
    return %arg0, %c0_i32 : i32, i32
  }
}

</mosaic_0001>

<llo_original>
// kernel: tpu_custom_call.1
$region0: #{tpu_custom_call.1}
  #allocation0 [shape = 'u32[]', space=smem, size = 0x4, offset = 0x4, fixed_abs, tag = 'smem constant byte address 0x4 - core index']
  #allocation1 [shape = 'u32[72,128]{1,0:T(1,128)}', space=vmem, size = 0x9000, scoped, tag = 'internal scratch']
  #allocation2 [shape = 'f32[1,1]{1,0:T(1,128)S(6)}', space=smem, size = 0x200, scoped, tag = 'scoped memory for tpu_custom_call.1']
  %s0 = inlined_call_operand.<no memory space> [shape: f32[1,1], index: 0, kind: input, shape index: {}]
  %s1 = inlined_call_operand.hbm [shape: f32[16,256], index: 1, kind: input, shape index: {}]
  %s2 = inlined_call_operand.hbm [shape: f32[16,256], index: 2, kind: output, shape index: {}]
  %s3 = sld [smem:[#allocation0]]
  $region22: #{tpu_custom_call.1} parent=0
    _
  %s5 = ssub.s32 1, %s3
  %s6 = scalar_select 0, %s5, %s3
  %7 = sst [smem:[#allocation2]] %s0
  $region1: #{tpu_custom_call.1} parent=0
    #allocation3 [shape = 'u8[16384]{0}', space=vmem, size = 0x4000, scoped, tag = 'input window, operand 1, single buffered']
    #allocation4 [shape = 's32[1]{0}', space=sflag, size = 0x4, scoped, tag = 'scoped memory for tpu_custom_call.1']
    #allocation5 [shape = 's32[1]{0}', space=sflag, size = 0x4, scoped, tag = 'scoped memory for tpu_custom_call.1']
    #allocation6 [shape = 'u8[16384]{0}', space=vmem, size = 0x4000, scoped, tag = 'output window, operand 0, single buffered']
    %8 = vsyncpa [#allocation4], 0
    %9 = vsyncpa [#allocation5], 0
    // Predicated region
    $region2: #{tpu_custom_call.1} parent=1 // pred_check
      _
    $region3: #{tpu_custom_call.1} parent=1 // pred_check_branch
      %11 = sbr.rel (0) target = $region5
    $region4: #{tpu_custom_call.1} parent=1 // pred_region
      _
    $region5: #{tpu_custom_call.1} parent=1 // pred_fallthru
      _
    // Predicated region
    $region6: #{tpu_custom_call.1} parent=1 // pred_check
      _
    $region7: #{tpu_custom_call.1} parent=1 // pred_check_branch
      %13 = sbr.rel (0) target = $region9
    $region8: #{tpu_custom_call.1} parent=1 // pred_region
      %15 = vsyncadd [#allocation4], 0
      %s16 = sshll.u32 %s1, 4
      %s17 = int_to_ptr.hbm [resolvable:$true] %s16
      %s18 = sshll.u32 [#allocation3], 4
      %s19 = int_to_ptr.vmem [resolvable:$true] %s18
      %24 = dma.hbm_to_vmem [thread:$0]  %s17, 512, %s19, [#allocation4], 256, 256, 16
    $region9: #{tpu_custom_call.1} parent=1 // pred_fallthru
      _
    // Predicated region
    $region10: #{tpu_custom_call.1} parent=1 // pred_check
      _
    $region11: #{tpu_custom_call.1} parent=1 // pred_check_branch
      %26 = sbr.rel (0) target = $region13
    $region12: #{tpu_custom_call.1} parent=1 // pred_region
      %28 = dma.done [#allocation4], 512
    $region13: #{tpu_custom_call.1} parent=1 // pred_fallthru
      _
    %s29 = sld [smem:[#allocation2]]
    %s30 = ssub.f32 0.0, %s29
    %v31 = vld [vmem:[#allocation3] sm:$0xff]
    %v32 = vld [vmem:[#allocation3 + $0x8] sm:$0xff]
    %v33 = vld [vmem:[#allocation3 + $0x10] sm:$0xff]
    %v34 = vld [vmem:[#allocation3 + $0x18] sm:$0xff]
    %v35 = vstv %s30
    %v36 = vmul.f32 %v31, %v35
    %v37 = vmul.f32 %v32, %v35
    %v38 = vmul.f32 %v33, %v35
    %v39 = vmul.f32 %v34, %v35
    %40 = vst [vmem:[#allocation6] sm:$0xff] %v36
    %41 = vst [vmem:[#allocation6 + $0x8] sm:$0xff] %v37
    %42 = vst [vmem:[#allocation6 + $0x10] sm:$0xff] %v38
    %43 = vst [vmem:[#allocation6 + $0x18] sm:$0xff] %v39
    // Predicated region
    $region14: #{tpu_custom_call.1} parent=1 // pred_check
      _
    $region15: #{tpu_custom_call.1} parent=1 // pred_check_branch
      %45 = sbr.rel (0) target = $region17
    $region16: #{tpu_custom_call.1} parent=1 // pred_region
      %47 = vsyncadd [#allocation5], 0
      %s48 = sshll.u32 [#allocation6], 4
      %s49 = int_to_ptr.vmem [resolvable:$true] %s48
      %s50 = sshll.u32 %s2, 4
      %s51 = int_to_ptr.hbm [resolvable:$true] %s50
      %56 = dma.vmem_to_hbm [thread:$0]  %s49, 512, %s51, [#allocation5], 256, 256, 16
    $region17: #{tpu_custom_call.1} parent=1 // pred_fallthru
      _
    // Predicated region
    $region18: #{tpu_custom_call.1} parent=1 // pred_check
      _
    $region19: #{tpu_custom_call.1} parent=1 // pred_check_branch
      %58 = sbr.rel (0) target = $region21
    $region20: #{tpu_custom_call.1} parent=1 // pred_region
      %60 = dma.done [#allocation5], 512
    $region21: #{tpu_custom_call.1} parent=1 // pred_fallthru
      _
    %61 = vsyncpa [#allocation4], 1
    %62 = vsyncpa [#allocation5], 1

</llo_original>
